<compile_context>
chip_gen: v5e
topology: v5e:2x2
jax: 0.10.0
libtpu: 0.0.40
codegen_flags: <defaults>
</compile_context>

<pallas_src>
import jax
import jax.numpy as jnp
from jax.experimental import pallas as pl
from jax.experimental.pallas import tpu as pltpu


def _normalize_kernel(scale_ref, bias_ref, img_ref, out_ref):
    # scale_ref, bias_ref: (tR, 1) float32 — per-row (= per (b, c)) constants.
    # img_ref:  (tR, tL) uint8 tile of the flattened (B*C, H*W) image.
    # out_ref:  (tR, tL) float tile.
    x = img_ref[...].astype(jnp.float32)
    y = x * scale_ref[...] + bias_ref[...]          # lane-broadcast of (tR, 1)
    out_ref[...] = y.astype(out_ref.dtype)


def _pick_tiles(bc: int, hw: int) -> tuple[int, int]:
    """Pick (tR, tL): ~1 MiB f32 output tile, layout-legal for u8 input / f32 output."""
    target_elems = (1 << 20) // 4                   # ~1 MiB of float32 per tile
    # Rows: full dim when small (always legal), else a multiple of 32
    # (uint8 packs 4 rows per sublane -> min u8 tile is (32, 128)).
    t_r = bc if bc <= 32 else 32
    # Lanes: multiple of 128 sized so the f32 tile is ~1 MiB; full dim when small.
    t_l_cap = max(128, (target_elems // max(t_r, 8)) // 128 * 128)
    t_l = hw if hw <= t_l_cap else t_l_cap
    return t_r, t_l


def object_detection_transform(img,
                               normalize: bool = True,
                               mean=(0.485, 0.456, 0.406),
                               std=(0.229, 0.224, 0.225),
                               out_dtype=jnp.float32):
    """Pallas equivalent of ObjectDetection.forward for (B,C,H,W) or (C,H,W) tensors."""
    # TODO(synk): PIL.Image inputs (F.pil_to_tensor) are host-side only; tensors expected here.
    squeeze_batch = False
    if img.ndim == 3:
        img = img[None]
        squeeze_batch = True
    assert img.ndim == 4, "expected (B, C, H, W) or (C, H, W)"
    B, C, H, W = img.shape

    # convert_image_dtype: integer dtypes rescale to [0, 1]; float dtypes pass through.
    if jnp.issubdtype(img.dtype, jnp.floating):
        to_unit = 1.0
    else:
        to_unit = 1.0 / float(jnp.iinfo(img.dtype).max)

    if normalize:
        mean_arr = jnp.asarray(mean, jnp.float32)
        std_arr = jnp.asarray(std, jnp.float32)
        scale_c = to_unit / std_arr                 # (C,)
        bias_c = -mean_arr / std_arr                # (C,)
    else:
        scale_c = jnp.full((C,), to_unit, jnp.float32)
        bias_c = jnp.zeros((C,), jnp.float32)

    BC, HW = B * C, H * W
    x2 = img.reshape(BC, HW)                        # free, contiguous
    row_scale = jnp.tile(scale_c, B).reshape(BC, 1) # per-row channel constants
    row_bias = jnp.tile(bias_c, B).reshape(BC, 1)

    tR, tL = _pick_tiles(BC, HW)
    grid = (pl.cdiv(BC, tR), pl.cdiv(HW, tL))

    tile_spec = pl.BlockSpec((tR, tL), lambda i, j: (i, j))
    row_spec = pl.BlockSpec((tR, 1), lambda i, j: (i, 0))

    out2 = pl.pallas_call(
        _normalize_kernel,
        out_shape=jax.ShapeDtypeStruct((BC, HW), out_dtype),
        grid_spec=pl.GridSpec(
            grid=grid,
            in_specs=[row_spec, row_spec, tile_spec],
            out_specs=tile_spec,
        ),
        compiler_params=pltpu.CompilerParams(
            dimension_semantics=("parallel", "parallel")),
    )(row_scale, row_bias, x2)

    out = out2.reshape(B, C, H, W)
    if squeeze_batch:
        out = out[0]
    return out


if __name__ == "__main__":
    key = jax.random.PRNGKey(0)
    B, C, H, W = 2, 3, 16, 16  # C=3 matches the module's (mean, std) tuples
    img = jax.random.randint(key, (B, C, H, W), 0, 256, dtype=jnp.int32).astype(jnp.uint8)

    out = object_detection_transform(img)
    out = jax.block_until_ready(out)

    # Pure-JAX reference for correctness check
    mean = jnp.asarray((0.485, 0.456, 0.406), jnp.float32).reshape(1, 3, 1, 1)
    std = jnp.asarray((0.229, 0.224, 0.225), jnp.float32).reshape(1, 3, 1, 1)
    ref = (img.astype(jnp.float32) / 255.0 - mean) / std

    assert out.shape == (B, C, H, W) and out.dtype == jnp.float32
    assert jnp.allclose(out, ref, atol=1e-5, rtol=1e-5)
    print("KERNEL_OK")
</pallas_src>

<mosaic_0001>
module attributes {stable_mosaic.version = 11 : i64} {
  func.func @_normalize_kernel(%arg0: i32, %arg1: i32, %arg2: memref<6x1xf32, #tpu.memory_space<vmem>>, %arg3: memref<6x1xf32, #tpu.memory_space<vmem>>, %arg4: memref<6x256xi8, #tpu.memory_space<vmem>>, %arg5: memref<6x256xf32, #tpu.memory_space<vmem>>) attributes {dimension_semantics = [#tpu.dimension_semantics<parallel>, #tpu.dimension_semantics<parallel>], iteration_bounds = array<i64: 1, 1>, scalar_prefetch = 0 : i64, scratch_operands = 0 : i64, tpu.core_type = #tpu.core_type<tc>, window_params = [{transform_indices = @transform_0, window_bounds = array<i64: 6, 1>}, {transform_indices = @transform_1, window_bounds = array<i64: 6, 1>}, {transform_indices = @transform_2, window_bounds = array<i64: 6, 256>}, {transform_indices = @transform_3, window_bounds = array<i64: 6, 256>}]} {
    %c0 = arith.constant 0 : index
    %c0_0 = arith.constant 0 : index
    %0 = vector.load %arg4[%c0, %c0_0] : memref<6x256xi8, #tpu.memory_space<vmem>>, vector<6x256xi8>
    %1 = arith.uitofp %0 : vector<6x256xi8> to vector<6x256xf32>
    %c0_1 = arith.constant 0 : index
    %c0_2 = arith.constant 0 : index
    %2 = vector.load %arg2[%c0_1, %c0_2] : memref<6x1xf32, #tpu.memory_space<vmem>>, vector<6x1xf32>
    %3 = vector.broadcast %2 : vector<6x1xf32> to vector<6x256xf32>
    %4 = arith.mulf %1, %3 : vector<6x256xf32>
    %c0_3 = arith.constant 0 : index
    %c0_4 = arith.constant 0 : index
    %5 = vector.load %arg3[%c0_3, %c0_4] : memref<6x1xf32, #tpu.memory_space<vmem>>, vector<6x1xf32>
    %6 = vector.broadcast %5 : vector<6x1xf32> to vector<6x256xf32>
    %7 = arith.addf %4, %6 : vector<6x256xf32>
    %c0_5 = arith.constant 0 : index
    %c0_6 = arith.constant 0 : index
    %8 = vector.load %arg5[%c0_5, %c0_6] : memref<6x256xf32, #tpu.memory_space<vmem>>, vector<6x256xf32>
    tpu.vector_store %arg5[%c0_5, %c0_6], %7 {strides = array<i32>} : memref<6x256xf32, #tpu.memory_space<vmem>>, vector<6x256xf32>,
    return
  }
  func.func @transform_0(%arg0: i32, %arg1: i32) -> (i32, i32) {
    %c0_i32 = arith.constant 0 : i32
    %c0_i32_0 = arith.constant 0 : i32
    return %arg0, %c0_i32 : i32, i32
  }
  func.func @transform_1(%arg0: i32, %arg1: i32) -> (i32, i32) {
    %c0_i32 = arith.constant 0 : i32
    %c0_i32_0 = arith.constant 0 : i32
    return %arg0, %c0_i32 : i32, i32
  }
  func.func @transform_2(%arg0: i32, %arg1: i32) -> (i32, i32) {
    %c0_i32 = arith.constant 0 : i32
    return %arg0, %arg1 : i32, i32
  }
  func.func @transform_3(%arg0: i32, %arg1: i32) -> (i32, i32) {
    %c0_i32 = arith.constant 0 : i32
    return %arg0, %arg1 : i32, i32
  }
}

</mosaic_0001>

<llo_original>
// kernel: tpu_custom_call.1
$region0: #{tpu_custom_call.1}
  #allocation0 [shape = 'u32[]', space=smem, size = 0x4, offset = 0x4, fixed_abs, tag = 'smem constant byte address 0x4 - core index']
  #allocation1 [shape = 'u32[72,128]{1,0:T(1,128)}', space=vmem, size = 0x9000, scoped, tag = 'internal scratch']
  %s0 = inlined_call_operand.vmem [shape: f32[6,1], index: 0, kind: input, shape index: {}]
  %s1 = inlined_call_operand.vmem [shape: f32[6,1], index: 1, kind: input, shape index: {}]
  %s2 = inlined_call_operand.vmem [shape: u8[6,256], index: 2, kind: input, shape index: {}]
  %s3 = inlined_call_operand.hbm [shape: f32[6,256], index: 3, kind: output, shape index: {}]
  %s4 = sld [smem:[#allocation0]]
  $region22: #{tpu_custom_call.1} parent=0
    _
  %s6 = ssub.s32 1, %s4
  %s7 = scalar_select 0, %s6, %s4
  $region1: #{tpu_custom_call.1} parent=0
    #allocation2 [shape = 'u8[8192]{0}', space=vmem, size = 0x2000, scoped, tag = 'output window, operand 0, single buffered']
    #allocation3 [shape = 's32[1]{0}', space=sflag, size = 0x4, scoped, tag = 'scoped memory for tpu_custom_call.1']
    %8 = vsyncpa [#allocation3], 0
    // Predicated region
    $region2: #{tpu_custom_call.1} parent=1 // pred_check
      _
    $region3: #{tpu_custom_call.1} parent=1 // pred_check_branch
      %10 = sbr.rel (0) target = $region5
    $region4: #{tpu_custom_call.1} parent=1 // pred_region
      _
    $region5: #{tpu_custom_call.1} parent=1 // pred_fallthru
      _
    // Predicated region
    $region6: #{tpu_custom_call.1} parent=1 // pred_check
      _
    $region7: #{tpu_custom_call.1} parent=1 // pred_check_branch
      %12 = sbr.rel (0) target = $region9
    $region8: #{tpu_custom_call.1} parent=1 // pred_region
      _
    $region9: #{tpu_custom_call.1} parent=1 // pred_fallthru
      _
    // Predicated region
    $region10: #{tpu_custom_call.1} parent=1 // pred_check
      _
    $region11: #{tpu_custom_call.1} parent=1 // pred_check_branch
      %14 = sbr.rel (0) target = $region13
    $region12: #{tpu_custom_call.1} parent=1 // pred_region
      _
    $region13: #{tpu_custom_call.1} parent=1 // pred_fallthru
      _
    %v15 = vld [vmem:[%s2] sm:$0xf]
    %v16 = vunpack.c.0.s8 %v15
    %v17 = vunpack.c.1.s8 %v15
    %v18 = vand.u32 %v16, 255
    %v19 = vand.u32 %v17, 255
    %v20 = vcvt.s32.f32 %v18
    %v21 = vcvt.s32.f32 %v19
    %v22 = vld [vmem:[%s0] sm:$0x3f]
    %24 = vset.pattern.permute.xlu0 0
    %25 = vperm.xlu0 %24, %v22
    %v26 = vpop.permute.xlu0 %25
    %v28 = vmul.f32 %v20, %v26
    %v29 = vmul.f32 %v21, %v26
    %v30 = vld [vmem:[%s1] sm:$0x3f]
    %32 = vset.pattern.permute.xlu0 0
    %33 = vperm.xlu0 %32, %v30
    %v34 = vpop.permute.xlu0 %33
    %v36 = vadd.f32 %v28, %v34
    %v37 = vadd.f32 %v29, %v34
    %38 = vst [vmem:[#allocation2] sm:$0x3f] %v36
    %39 = vst [vmem:[#allocation2 + $0x8] sm:$0x3f] %v37
    // Predicated region
    $region14: #{tpu_custom_call.1} parent=1 // pred_check
      _
    $region15: #{tpu_custom_call.1} parent=1 // pred_check_branch
      %41 = sbr.rel (0) target = $region17
    $region16: #{tpu_custom_call.1} parent=1 // pred_region
      %43 = vsyncadd [#allocation3], 0
      %s45 = sshll.u32 [#allocation2], 4
      %s46 = int_to_ptr.vmem [resolvable:$true] %s45
      %s47 = sshll.u32 %s3, 4
      %s48 = int_to_ptr.hbm [resolvable:$true] %s47
      %50 = dma.vmem_to_hbm [thread:$0]  %s46, 256, %s48, [#allocation3]
    $region17: #{tpu_custom_call.1} parent=1 // pred_fallthru
      _
    // Predicated region
    $region18: #{tpu_custom_call.1} parent=1 // pred_check
      _
    $region19: #{tpu_custom_call.1} parent=1 // pred_check_branch
      %52 = sbr.rel (0) target = $region21
    $region20: #{tpu_custom_call.1} parent=1 // pred_region
      %54 = dma.done [#allocation3], 256
    $region21: #{tpu_custom_call.1} parent=1 // pred_fallthru
      _
    %55 = vsyncpa [#allocation3], 1

</llo_original>
